<compile_context>
chip_gen: v7x
topology: tpu7x:2x2x1
jax: 0.10.0
libtpu: 0.0.40
codegen_flags: <defaults>
</compile_context>

<pallas_src>
import math

import jax
import jax.numpy as jnp
from jax.experimental import pallas as pl
from jax.experimental.pallas import tpu as pltpu

# Folded Horner constants: inner = x * (C1 + C2 * x^2) == sqrt(2/pi)*(x + 0.044715 x^3)
_C1 = math.sqrt(2.0 / math.pi)
_C2 = 0.044715 * math.sqrt(2.0 / math.pi)


def _make_gelu_kernel(compute_dtype):
    def kernel(x_ref, o_ref):
        x = x_ref[...].astype(compute_dtype)
        # Polynomial on the VPU, tanh on the EUP slot (free w.r.t. VALU).
        inner = x * (_C1 + _C2 * (x * x))
        y = 0.5 * x * (1.0 + jnp.tanh(inner))
        o_ref[...] = y.astype(o_ref.dtype)

    return kernel


def _round_up(a, b):
    return ((a + b - 1) // b) * b


def _chip_config():
    """Per-generation tuning: #TensorCores, per-buffer block bytes, bf16 compute."""
    try:
        kind = jax.devices()[0].device_kind.lower()
    except Exception:
        kind = ""
    if "v7" in kind or "7x" in kind:
        # 2 TCs/chip, 32 MiB scoped VMEM default, bf16 VPU/EUP.
        return {"num_cores": 2, "block_bytes": 4 << 20, "bf16_compute": True, "in_buffers": 3}
    if "v6" in kind or "6e" in kind:
        # 1 TC, 32 MiB scoped VMEM default, bf16 VPU/EUP.
        return {"num_cores": 1, "block_bytes": 4 << 20, "bf16_compute": True, "in_buffers": 2}
    # v5e / older / unknown: conservative (16 MiB scoped VMEM default, f32-only VPU/EUP).
    return {"num_cores": 1, "block_bytes": 2 << 20, "bf16_compute": False, "in_buffers": 2}


def gelu(x, *, donate=False, lane=128):
    """tanh-GELU over an arbitrary-shaped array via a Pallas TPU kernel."""
    orig_shape = x.shape
    orig_dtype = x.dtype
    n = x.size
    if n == 0:
        return x

    cfg = _chip_config()
    itemsize = jnp.dtype(orig_dtype).itemsize
    # Sublane packing: second-to-last block dim multiple of 8 (f32) / 16 (bf16) / 32 (int8).
    row_align = max(8, 32 // itemsize)

    compute_dtype = jnp.float32
    if cfg["bf16_compute"] and orig_dtype == jnp.bfloat16:
        compute_dtype = jnp.bfloat16

    # TODO(synk): the non-multiple-of-128 path pays a full pad + slice HBM pass
    # (~3x traffic). Typical ConvNext activations are 128-aligned and skip it;
    # zero-padding is safe because GELU(0) == 0 and the pad is sliced off.
    n_pad = pl.cdiv(n, lane) * lane
    x_flat = jnp.ravel(x)
    padded = n_pad != n
    if padded:
        x_flat = jnp.pad(x_flat, (0, n_pad - n))
    rows = n_pad // lane
    x2d = x_flat.reshape(rows, lane)

    # Dtype-aware block rows from the per-generation byte budget
    # (f32: 4096 rows on v5e / 8192 on v6e+; bf16: 8192 / 16384).
    block_rows = max(row_align,
                     (cfg["block_bytes"] // (lane * itemsize)) // row_align * row_align)

    if rows <= row_align:
        br = rows  # full-extent block (always legal), tiny input anyway
    else:
        # Cap per-core so the "parallel" grid axis shards across all TensorCores.
        per_core = _round_up(pl.cdiv(rows, cfg["num_cores"]), row_align)
        br = min(block_rows, per_core)
    grid = (pl.cdiv(rows, br),)

    # Extra DMA pipeline depth on v7x only, and only when the grid is long
    # enough for it to matter (VMEM headroom: 3*4 + 2*4 = 20 MiB < 32 MiB).
    if cfg["in_buffers"] != 2 and grid[0] > 2:
        in_spec = pl.BlockSpec((br, lane), lambda i: (i, 0),
                               pipeline_mode=pl.Buffered(cfg["in_buffers"]))
    else:
        in_spec = pl.BlockSpec((br, lane), lambda i: (i, 0))

    cost = pl.CostEstimate(
        flops=8 * rows * lane,
        transcendentals=rows * lane,
        bytes_accessed=2 * rows * lane * itemsize,
    )

    out2d = pl.pallas_call(
        _make_gelu_kernel(compute_dtype),
        out_shape=jax.ShapeDtypeStruct((rows, lane), orig_dtype),
        grid_spec=pltpu.PrefetchScalarGridSpec(
            num_scalar_prefetch=0,
            grid=grid,
            in_specs=[in_spec],
            out_specs=pl.BlockSpec((br, lane), lambda i: (i, 0)),
        ),
        compiler_params=pltpu.CompilerParams(
            dimension_semantics=("parallel",),
        ),
        cost_estimate=cost,
        # Alias x -> out when the caller can donate x (avoids a second
        # full-size HBM buffer); off by default so x stays reusable.
        input_output_aliases=({0: 0} if donate else {}),
    )(x2d)

    out_flat = out2d.reshape(-1)
    if padded:
        out_flat = out_flat[:n]
    return out_flat.reshape(orig_shape)


def gelu_ref(x):
    xf = x.astype(jnp.float32)
    y = 0.5 * xf * (1.0 + jnp.tanh(math.sqrt(2.0 / math.pi) * (xf + 0.044715 * xf ** 3)))
    return y.astype(x.dtype)


if __name__ == "__main__":
    key = jax.random.PRNGKey(0)

    # NCHW activation-like input, as the module would see inside ConvNext.
    x = jax.random.normal(key, (2, 4, 16, 16), dtype=jnp.float32)
    out = jax.block_until_ready(gelu(x))
    ref = gelu_ref(x)
    assert out.shape == x.shape and out.dtype == x.dtype
    assert jnp.allclose(out, ref, atol=1e-5, rtol=1e-5), "f32 mismatch vs reference"

    # bf16 I/O path (bf16 compute on v6e/v7x, f32 compute on v5e).
    xb = jax.random.normal(jax.random.PRNGKey(1), (2, 4, 16, 16), dtype=jnp.bfloat16)
    outb = jax.block_until_ready(gelu(xb))
    refb = gelu_ref(xb)
    assert outb.dtype == jnp.bfloat16
    assert jnp.allclose(outb.astype(jnp.float32), refb.astype(jnp.float32),
                        atol=2e-2, rtol=2e-2), "bf16 mismatch vs reference"

    # Odd size (not a multiple of 128) exercises the pad/clip path.
    xo = jax.random.normal(jax.random.PRNGKey(2), (3, 5, 7), dtype=jnp.float32)
    outo = jax.block_until_ready(gelu(xo))
    refo = gelu_ref(xo)
    assert outo.shape == xo.shape
    assert jnp.allclose(outo, refo, atol=1e-5, rtol=1e-5), "odd-size mismatch vs reference"

    print("KERNEL_OK")
</pallas_src>

<mosaic_0001>
module attributes {stable_mosaic.version = 11 : i64} {
  func.func @kernel(%arg0: i32, %arg1: memref<16x128xf32, #tpu.memory_space<vmem>>, %arg2: memref<16x128xf32, #tpu.memory_space<vmem>>) attributes {dimension_semantics = [#tpu.dimension_semantics<parallel>], iteration_bounds = array<i64: 1>, scalar_prefetch = 0 : i64, scratch_operands = 0 : i64, tpu.core_type = #tpu.core_type<tc>, window_params = [{transform_indices = @transform_0, window_bounds = array<i64: 16, 128>}, {transform_indices = @transform_1, window_bounds = array<i64: 16, 128>}]} {
    %c0 = arith.constant 0 : index
    %c0_0 = arith.constant 0 : index
    %0 = vector.load %arg1[%c0, %c0_0] : memref<16x128xf32, #tpu.memory_space<vmem>>, vector<16x128xf32>
    %1 = arith.mulf %0, %0 : vector<16x128xf32>
    %cst = arith.constant 0.0356774069 : f32
    %2 = vector.broadcast %cst : f32 to vector<16x128xf32>
    %3 = arith.mulf %2, %1 : vector<16x128xf32>
    %cst_1 = arith.constant 0.797884583 : f32
    %4 = vector.broadcast %cst_1 : f32 to vector<16x128xf32>
    %5 = arith.addf %4, %3 : vector<16x128xf32>
    %6 = arith.mulf %0, %5 : vector<16x128xf32>
    %cst_2 = arith.constant 5.000000e-01 : f32
    %7 = vector.broadcast %cst_2 : f32 to vector<16x128xf32>
    %8 = arith.mulf %7, %0 : vector<16x128xf32>
    %9 = math.tanh %6 : vector<16x128xf32>
    %cst_3 = arith.constant 1.000000e+00 : f32
    %10 = vector.broadcast %cst_3 : f32 to vector<16x128xf32>
    %11 = arith.addf %10, %9 : vector<16x128xf32>
    %12 = arith.mulf %8, %11 : vector<16x128xf32>
    %c0_4 = arith.constant 0 : index
    %c0_5 = arith.constant 0 : index
    %13 = vector.load %arg2[%c0_4, %c0_5] : memref<16x128xf32, #tpu.memory_space<vmem>>, vector<16x128xf32>
    tpu.vector_store %arg2[%c0_4, %c0_5], %12 {strides = array<i32>} : memref<16x128xf32, #tpu.memory_space<vmem>>, vector<16x128xf32>,
    return
  }
  func.func @transform_0(%arg0: i32) -> (i32, i32) {
    %c0_i32 = arith.constant 0 : i32
    %c0_i32_0 = arith.constant 0 : i32
    return %arg0, %c0_i32 : i32, i32
  }
  func.func @transform_1(%arg0: i32) -> (i32, i32) {
    %c0_i32 = arith.constant 0 : i32
    %c0_i32_0 = arith.constant 0 : i32
    return %arg0, %c0_i32 : i32, i32
  }
}

</mosaic_0001>

<llo_original>
// kernel: tpu_custom_call.1
$region0: #{tpu_custom_call.1}
  #allocation0 [shape = 'u32[]', space=smem, size = 0x4, offset = 0x4, fixed_abs, tag = 'smem constant byte address 0x4 - core index']
  #allocation1 [shape = 'u32[144,128]{1,0:T(1,128)}', space=vmem, size = 0x12000, scoped, tag = 'internal scratch']
  %s0 = inlined_call_operand.hbm [shape: f32[16,128], index: 0, kind: input, shape index: {}]
  %s1 = inlined_call_operand.hbm [shape: f32[16,128], index: 1, kind: output, shape index: {}]
  %s2 = sld [smem:[#allocation0]]
  $region18: #{tpu_custom_call.1} parent=0
    _
  %s4 = ssub.s32 1, %s2
  %s5 = scalar_select 0, %s4, %s2
  $region1: #{tpu_custom_call.1} parent=0
    #allocation2 [shape = 'u8[8192]{0}', space=vmem, size = 0x2000, scoped, tag = 'input window, operand 0, single buffered']
    #allocation3 [shape = 's32[1]{0}', space=sflag, size = 0x4, scoped, tag = 'scoped memory for tpu_custom_call.1']
    #allocation4 [shape = 's32[1]{0}', space=sflag, size = 0x4, scoped, tag = 'scoped memory for tpu_custom_call.1']
    #allocation5 [shape = 'u8[8192]{0}', space=vmem, size = 0x2000, scoped, tag = 'output window, operand 0, single buffered']
    %6 = vsyncpa [#allocation3], 0
    %7 = vsyncpa [#allocation4], 0
    // Predicated region
    $region2: #{tpu_custom_call.1} parent=1 // pred_check
      _
    $region3: #{tpu_custom_call.1} parent=1 // pred_check_branch
      %9 = sbr.rel (0) target = $region5
    $region4: #{tpu_custom_call.1} parent=1 // pred_region
      %s11 = ssub.s32 256, 256
      %12 = vsyncadd [#allocation3], %s11
      %s13 = sshll.u32 [#allocation2], 4
      %s14 = int_to_ptr.vmem [resolvable:$true] %s13
      %19 = dma.hbm_to_vmem [thread:$0]  %s0, 256, %s14, [#allocation3], 128, 128, 8
    $region5: #{tpu_custom_call.1} parent=1 // pred_fallthru
      _
    // Predicated region
    $region6: #{tpu_custom_call.1} parent=1 // pred_check
      _
    $region7: #{tpu_custom_call.1} parent=1 // pred_check_branch
      %21 = sbr.rel (0) target = $region9
    $region8: #{tpu_custom_call.1} parent=1 // pred_region
      %22 = dma.done [#allocation3], 256
    $region9: #{tpu_custom_call.1} parent=1 // pred_fallthru
      _
    %v23 = vld [vmem:[#allocation2] sm:$0xff]
    %v24 = vld [vmem:[#allocation2 + $0x8] sm:$0xff]
    %v25 = vmul.f32 %v23, %v23
    %v26 = vmul.f32 %v24, %v24
    %v27 = vmul.f32 %v25, 0.035677407
    %v28 = vmul.f32 %v26, 0.035677407
    %v29 = vadd.f32 %v27, 0.7978846
    %v30 = vadd.f32 %v28, 0.7978846
    %v31 = vmul.f32 %v23, %v29
    %v32 = vmul.f32 %v24, %v30
    %v33 = vmul.f32 %v23, 0.5
    %v34 = vmul.f32 %v24, 0.5
    %v35 = vtanh.pop %v31
    %v36 = vtanh.pop %v32
    %v37 = vadd.f32 %v35, 1.0
    %v38 = vadd.f32 %v36, 1.0
    %v39 = vmul.f32 %v33, %v37
    %v40 = vmul.f32 %v34, %v38
    %41 = vst [vmem:[#allocation5] sm:$0xff] %v39
    %42 = vst [vmem:[#allocation5 + $0x8] sm:$0xff] %v40
    // Predicated region
    $region10: #{tpu_custom_call.1} parent=1 // pred_check
      _
    $region11: #{tpu_custom_call.1} parent=1 // pred_check_branch
      %44 = sbr.rel (0) target = $region13
    $region12: #{tpu_custom_call.1} parent=1 // pred_region
      %s46 = ssub.s32 256, 256
      %47 = vsyncadd [#allocation4], %s46
      %s48 = sshll.u32 [#allocation5], 4
      %s49 = int_to_ptr.vmem [resolvable:$true] %s48
      %54 = dma.vmem_to_hbm [thread:$0]  %s49, 256, %s1, [#allocation4], 128, 128, 8
    $region13: #{tpu_custom_call.1} parent=1 // pred_fallthru
      _
    // Predicated region
    $region14: #{tpu_custom_call.1} parent=1 // pred_check
      _
    $region15: #{tpu_custom_call.1} parent=1 // pred_check_branch
      %56 = sbr.rel (0) target = $region17
    $region16: #{tpu_custom_call.1} parent=1 // pred_region
      %57 = dma.done [#allocation4], 256
    $region17: #{tpu_custom_call.1} parent=1 // pred_fallthru
      _
    %58 = vsyncpa [#allocation3], 1
    %59 = vsyncpa [#allocation4], 1

</llo_original>
